<compile_context>
chip_gen: v5e
topology: v5e:2x2
jax: 0.10.0
libtpu: 0.0.40
codegen_flags: <defaults>
</compile_context>

<pallas_src>
import numpy as np
import jax
import jax.numpy as jnp
from jax.experimental import pallas as pl
from jax.experimental.pallas import tpu as pltpu

NU = 0.25                               # Poisson ratio of the standard Mogi source
_MOGI_COEF = (1.0 - NU) / np.pi


# ----------------------------------------------------------------------------
# Constant folding of the rescale step (static config -> Python immediates).
# ----------------------------------------------------------------------------
def _fold_rescale(z_phy_ranges):
    """Per-parameter (column, scale, offset) with unit conversions folded in."""
    folded = {}
    for i, name in enumerate(z_phy_ranges.keys()):
        mn = float(z_phy_ranges[name]["min"])
        mx = float(z_phy_ranges[name]["max"])
        s, o = (mx - mn), mn
        if name in ("xcen", "ycen", "d"):        # km -> m
            s, o = s * 1000.0, o * 1000.0
        if name == "dV":                         # dV * 1e5 - 1e7
            s, o = s * 1.0e5, o * 1.0e5 - 1.0e7
        folded[name] = (i, s, o)
    return folded


# ----------------------------------------------------------------------------
# Pallas kernel (batch on the lane axis, per-component dense outputs).
# ----------------------------------------------------------------------------
def _make_mogi_kernel(folded):
    ix, sx, ox = folded["xcen"]
    iy, sy, oy = folded["ycen"]
    id_, sd, od = folded["d"]
    iv, sv, ov = folded["dV"]

    def kernel(z_ref, xsta_ref, ysta_ref, mean_ref, istd_ref,
               ux_ref, uy_ref, uz_ref):
        # z block is (4, TB): parameters on sublanes, batch on lanes.
        # Sublane slices -> (1, TB); their broadcasts below are sublane
        # broadcasts (near free), not cross-lane splats.
        xcen = z_ref[ix:ix + 1, :] * sx + ox
        ycen = z_ref[iy:iy + 1, :] * sy + oy
        d = z_ref[id_:id_ + 1, :] * sd + od
        dV = z_ref[iv:iv + 1, :] * sv + ov

        dx = xsta_ref[...] - xcen                       # (N, TB)
        dy = ysta_ref[...] - ycen
        r2 = dx * dx + dy * dy + d * d
        # Clamp only matters for degenerate configs / zero-padded columns.
        inv_r = jax.lax.rsqrt(jnp.maximum(r2, 1e-12))
        inv_r3 = inv_r * inv_r * inv_r
        c = (_MOGI_COEF * dV) * inv_r3                  # (N, TB)

        # Per-component outputs: full-extent sublane dim, 128-multiple lane
        # dim -> dense, unmasked, aligned stores.
        ux_ref[...] = (c * dx - mean_ref[0]) * istd_ref[0]
        uy_ref[...] = (c * dy - mean_ref[1]) * istd_ref[1]
        uz_ref[...] = (c * d - mean_ref[2]) * istd_ref[2]

    return kernel


# ----------------------------------------------------------------------------
# Tiling: lane-axis batch tile, VMEM-safe, >= 2 grid steps when possible.
# ----------------------------------------------------------------------------
def _choose_batch_tile(batch, n_sta, max_tile=8192):
    # Double-buffered footprint per batch column: z (4 f32) + 3 outputs (3N f32).
    bytes_per_col = 4 * (4 + 3 * n_sta)
    cap = (12 << 20) // (2 * bytes_per_col)      # ~12 MiB budget, safe on v7x
    cap = max(128, (cap // 128) * 128)
    tb = min(max_tile, cap)
    b_ceil = pl.cdiv(batch, 128) * 128
    if tb >= b_ceil:
        # Whole batch fits in one tile; keep >= 2 reasonably large steps when
        # possible so the "parallel" axis shards across v7x's two TensorCores.
        tb = ((b_ceil // 2) // 128) * 128 if b_ceil >= 256 else b_ceil
        tb = max(128, tb)
    b_pad = pl.cdiv(batch, tb) * tb
    return tb, b_pad


# ----------------------------------------------------------------------------
# Wrapper (mirrors Physics_Mogi.forward).
# ----------------------------------------------------------------------------
def physics_mogi_forward(z_phy, z_phy_ranges, x_sta, y_sta, x_mean, x_scale,
                         *, max_tile=8192, min_pallas_elems=128 * 1024,
                         force_pallas=False):
    """z_phy: [B, 4] or [B, T, 4] in [0, 1].  Returns [B, 3N] or [B, T, 3N]."""
    z_phy = jnp.asarray(z_phy, jnp.float32)
    lead_shape = z_phy.shape[:-1]
    z2d = z_phy.reshape(-1, z_phy.shape[-1])
    batch = z2d.shape[0]

    x_sta_f = jnp.asarray(x_sta, jnp.float32).reshape(-1)
    y_sta_f = jnp.asarray(y_sta, jnp.float32).reshape(-1)
    n_sta = x_sta_f.shape[0]
    x_mean = jnp.asarray(x_mean, jnp.float32).reshape(1, 3 * n_sta)
    x_scale = jnp.asarray(x_scale, jnp.float32).reshape(1, 3 * n_sta)

    # Tiny problems: pallas_call launch + DMA setup dominates -> let XLA fuse.
    if (batch * 3 * n_sta < min_pallas_elems) and not force_pallas:
        out = physics_mogi_reference(z2d, z_phy_ranges, x_sta_f[None, :],
                                     y_sta_f[None, :], x_mean, x_scale)
        return out.reshape(*lead_shape, 3 * n_sta)

    folded = _fold_rescale(z_phy_ranges)
    kernel = _make_mogi_kernel(folded)
    tb, b_pad = _choose_batch_tile(batch, n_sta, max_tile)

    # Batch on the lane axis; zero-padded columns are harmless (the folded
    # depth offset keeps r^2 bounded away from 0) and are sliced off below.
    z_t = z2d.T
    if b_pad != batch:
        z_t = jnp.pad(z_t, ((0, 0), (0, b_pad - batch)))

    x_sta_c = x_sta_f[:, None]                            # (N, 1)
    y_sta_c = y_sta_f[:, None]
    mean3 = x_mean.reshape(3, n_sta)[:, :, None]          # (3, N, 1)
    istd3 = (1.0 / x_scale).reshape(3, n_sta)[:, :, None]

    const2 = lambda i: (0, 0)                             # VMEM-resident consts
    const3 = lambda i: (0, 0, 0)
    comp_shape = jax.ShapeDtypeStruct((n_sta, b_pad), jnp.float32)
    comp_spec = pl.BlockSpec((n_sta, tb), lambda i: (0, i))

    ux, uy, uz = pl.pallas_call(
        kernel,
        out_shape=(comp_shape, comp_shape, comp_shape),
        grid=(b_pad // tb,),
        in_specs=[
            pl.BlockSpec((4, tb), lambda i: (0, i)),      # z (lane-tiled batch)
            pl.BlockSpec((n_sta, 1), const2),             # station x
            pl.BlockSpec((n_sta, 1), const2),             # station y
            pl.BlockSpec((3, n_sta, 1), const3),          # x_mean per component
            pl.BlockSpec((3, n_sta, 1), const3),          # 1 / x_scale
        ],
        out_specs=(comp_spec, comp_spec, comp_spec),
        compiler_params=pltpu.CompilerParams(
            dimension_semantics=("parallel",)),
    )(z_t, x_sta_c, y_sta_c, mean3, istd3)

    # Layout plumbing back to the module's (B, 3N) convention.
    out = jnp.concatenate(
        [ux[:, :batch].T, uy[:, :batch].T, uz[:, :batch].T], axis=-1)
    return out.reshape(*lead_shape, 3 * n_sta)


# ----------------------------------------------------------------------------
# Pure-JAX reference (mirrors the PyTorch forward); also the small-size path.
# ----------------------------------------------------------------------------
def physics_mogi_reference(z_phy, z_phy_ranges, x_sta, y_sta, x_mean, x_scale):
    r = {}
    for i, name in enumerate(z_phy_ranges.keys()):
        mn = z_phy_ranges[name]["min"]
        mx = z_phy_ranges[name]["max"]
        v = z_phy[..., i] * (mx - mn) + mn
        if name in ("xcen", "ycen", "d"):
            v = v * 1000.0
        r[name] = v
    r["dV"] = r["dV"] * 1.0e5 - 1.0e7
    xcen = r["xcen"][..., None]
    ycen = r["ycen"][..., None]
    d = r["d"][..., None]
    dV = r["dV"][..., None]
    dx = x_sta - xcen
    dy = y_sta - ycen
    r2 = dx * dx + dy * dy + d * d
    inv_r3 = 1.0 / (r2 * jnp.sqrt(r2))
    c = ((1.0 - NU) / jnp.pi) * dV
    out = jnp.concatenate([c * dx * inv_r3, c * dy * inv_r3, c * d * inv_r3],
                          axis=-1)
    return (out - x_mean) / x_scale


if __name__ == "__main__":
    N_STA = 12   # number of GPS stations

    # Deterministic synthetic "config" (normally loaded from JSON / .npy).
    z_phy_ranges = {
        "xcen": {"min": -5.0, "max": 5.0},    # km
        "ycen": {"min": -5.0, "max": 5.0},    # km
        "d":    {"min": 1.0,  "max": 10.0},   # km (depth)
        "dV":   {"min": 0.0,  "max": 300.0},  # volume-change latent units
    }

    key = jax.random.PRNGKey(0)
    k1, k2, k3, k4, k5, k6 = jax.random.split(key, 6)

    # Station coordinates (km -> m, like `* 1000` in __init__).
    x_sta = jax.random.uniform(k1, (N_STA,), jnp.float32, -20.0, 20.0) * 1000.0
    y_sta = jax.random.uniform(k2, (N_STA,), jnp.float32, -20.0, 20.0) * 1000.0

    # Standardization stats (deterministic; scale strictly positive).
    x_mean = jax.random.normal(k3, (1, 3 * N_STA), jnp.float32) * 1e-3
    x_scale = jax.random.uniform(k4, (1, 3 * N_STA), jnp.float32, 0.5, 1.5) * 1e-2

    # Case 1: small batch, single 128-wide lane tile (exercises padding).
    z_small = jax.random.uniform(k5, (10, 4), jnp.float32)
    out_small = jax.block_until_ready(
        physics_mogi_forward(z_small, z_phy_ranges, x_sta, y_sta,
                             x_mean, x_scale, force_pallas=True))
    ref_small = physics_mogi_reference(z_small, z_phy_ranges, x_sta[None, :],
                                       y_sta[None, :], x_mean, x_scale)
    np.testing.assert_allclose(np.asarray(out_small), np.asarray(ref_small),
                               rtol=1e-5, atol=1e-5)

    # Case 2: multi-step grid (batch 300 -> three 128-wide lane tiles).
    z_big = jax.random.uniform(k6, (300, 4), jnp.float32)
    out_big = jax.block_until_ready(
        physics_mogi_forward(z_big, z_phy_ranges, x_sta, y_sta,
                             x_mean, x_scale, force_pallas=True))
    ref_big = physics_mogi_reference(z_big, z_phy_ranges, x_sta[None, :],
                                     y_sta[None, :], x_mean, x_scale)
    np.testing.assert_allclose(np.asarray(out_big), np.asarray(ref_big),
                               rtol=1e-5, atol=1e-5)

    # Case 3: the [B, T, 4] branch of rescale (flattened internally).
    z_3d = z_big[:8].reshape(2, 4, 4)
    out_3d = jax.block_until_ready(
        physics_mogi_forward(z_3d, z_phy_ranges, x_sta, y_sta,
                             x_mean, x_scale, force_pallas=True))
    assert out_3d.shape == (2, 4, 3 * N_STA)
    np.testing.assert_allclose(np.asarray(out_3d.reshape(8, -1)),
                               np.asarray(ref_big[:8]), rtol=1e-5, atol=1e-5)

    print("KERNEL_OK")
</pallas_src>

<mosaic_0001>
module attributes {stable_mosaic.version = 11 : i64} {
  func.func @kernel(%arg0: i32, %arg1: memref<4x128xf32, #tpu.memory_space<vmem>>, %arg2: memref<12x1xf32, #tpu.memory_space<vmem>>, %arg3: memref<12x1xf32, #tpu.memory_space<vmem>>, %arg4: memref<3x12x1xf32, #tpu.memory_space<vmem>>, %arg5: memref<3x12x1xf32, #tpu.memory_space<vmem>>, %arg6: memref<12x128xf32, #tpu.memory_space<vmem>>, %arg7: memref<12x128xf32, #tpu.memory_space<vmem>>, %arg8: memref<12x128xf32, #tpu.memory_space<vmem>>) attributes {dimension_semantics = [#tpu.dimension_semantics<parallel>], iteration_bounds = array<i64: 1>, scalar_prefetch = 0 : i64, scratch_operands = 0 : i64, tpu.core_type = #tpu.core_type<tc>, window_params = [{transform_indices = @transform_0, window_bounds = array<i64: 4, 128>}, {pipeline_mode = #tpu.pipeline_mode<synchronous>, transform_indices = @transform_1, window_bounds = array<i64: 12, 1>}, {pipeline_mode = #tpu.pipeline_mode<synchronous>, transform_indices = @transform_2, window_bounds = array<i64: 12, 1>}, {pipeline_mode = #tpu.pipeline_mode<synchronous>, transform_indices = @transform_3, window_bounds = array<i64: 3, 12, 1>}, {pipeline_mode = #tpu.pipeline_mode<synchronous>, transform_indices = @transform_4, window_bounds = array<i64: 3, 12, 1>}, {transform_indices = @transform_5, window_bounds = array<i64: 12, 128>}, {transform_indices = @transform_6, window_bounds = array<i64: 12, 128>}, {transform_indices = @transform_7, window_bounds = array<i64: 12, 128>}]} {
    %c0 = arith.constant 0 : index
    %c0_0 = arith.constant 0 : index
    %0 = vector.load %arg1[%c0, %c0_0] : memref<4x128xf32, #tpu.memory_space<vmem>>, vector<1x128xf32>
    %cst = arith.constant 1.000000e+04 : f32
    %1 = vector.broadcast %cst : f32 to vector<1x128xf32>
    %2 = arith.mulf %0, %1 : vector<1x128xf32>
    %cst_1 = arith.constant -5.000000e+03 : f32
    %3 = vector.broadcast %cst_1 : f32 to vector<1x128xf32>
    %4 = arith.addf %2, %3 : vector<1x128xf32>
    %c1 = arith.constant 1 : index
    %c0_2 = arith.constant 0 : index
    %5 = vector.load %arg1[%c1, %c0_2] : memref<4x128xf32, #tpu.memory_space<vmem>>, vector<1x128xf32>
    %cst_3 = arith.constant 1.000000e+04 : f32
    %6 = vector.broadcast %cst_3 : f32 to vector<1x128xf32>
    %7 = arith.mulf %5, %6 : vector<1x128xf32>
    %cst_4 = arith.constant -5.000000e+03 : f32
    %8 = vector.broadcast %cst_4 : f32 to vector<1x128xf32>
    %9 = arith.addf %7, %8 : vector<1x128xf32>
    %c2 = arith.constant 2 : index
    %c0_5 = arith.constant 0 : index
    %10 = vector.load %arg1[%c2, %c0_5] : memref<4x128xf32, #tpu.memory_space<vmem>>, vector<1x128xf32>
    %cst_6 = arith.constant 9.000000e+03 : f32
    %11 = vector.broadcast %cst_6 : f32 to vector<1x128xf32>
    %12 = arith.mulf %10, %11 : vector<1x128xf32>
    %cst_7 = arith.constant 1.000000e+03 : f32
    %13 = vector.broadcast %cst_7 : f32 to vector<1x128xf32>
    %14 = arith.addf %12, %13 : vector<1x128xf32>
    %c3 = arith.constant 3 : index
    %c0_8 = arith.constant 0 : index
    %15 = vector.load %arg1[%c3, %c0_8] : memref<4x128xf32, #tpu.memory_space<vmem>>, vector<1x128xf32>
    %cst_9 = arith.constant 3.000000e+07 : f32
    %16 = vector.broadcast %cst_9 : f32 to vector<1x128xf32>
    %17 = arith.mulf %15, %16 : vector<1x128xf32>
    %cst_10 = arith.constant -1.000000e+07 : f32
    %18 = vector.broadcast %cst_10 : f32 to vector<1x128xf32>
    %19 = arith.addf %17, %18 : vector<1x128xf32>
    %c0_11 = arith.constant 0 : index
    %c0_12 = arith.constant 0 : index
    %20 = vector.load %arg2[%c0_11, %c0_12] : memref<12x1xf32, #tpu.memory_space<vmem>>, vector<12x1xf32>
    %21 = vector.broadcast %20 : vector<12x1xf32> to vector<12x128xf32>
    %22 = vector.broadcast %4 : vector<1x128xf32> to vector<12x128xf32>
    %23 = arith.subf %21, %22 : vector<12x128xf32>
    %c0_13 = arith.constant 0 : index
    %c0_14 = arith.constant 0 : index
    %24 = vector.load %arg3[%c0_13, %c0_14] : memref<12x1xf32, #tpu.memory_space<vmem>>, vector<12x1xf32>
    %25 = vector.broadcast %24 : vector<12x1xf32> to vector<12x128xf32>
    %26 = vector.broadcast %9 : vector<1x128xf32> to vector<12x128xf32>
    %27 = arith.subf %25, %26 : vector<12x128xf32>
    %28 = arith.mulf %23, %23 : vector<12x128xf32>
    %29 = arith.mulf %27, %27 : vector<12x128xf32>
    %30 = arith.addf %28, %29 : vector<12x128xf32>
    %31 = arith.mulf %14, %14 : vector<1x128xf32>
    %32 = vector.broadcast %31 : vector<1x128xf32> to vector<12x128xf32>
    %33 = arith.addf %30, %32 : vector<12x128xf32>
    %cst_15 = arith.constant 9.99999996E-13 : f32
    %34 = vector.broadcast %cst_15 : f32 to vector<12x128xf32>
    %35 = arith.maximumf %33, %34 : vector<12x128xf32>
    %36 = math.rsqrt %35 : vector<12x128xf32>
    %37 = arith.mulf %36, %36 : vector<12x128xf32>
    %38 = arith.mulf %37, %36 : vector<12x128xf32>
    %cst_16 = arith.constant 0.238732412 : f32
    %39 = vector.broadcast %cst_16 : f32 to vector<1x128xf32>
    %40 = arith.mulf %39, %19 : vector<1x128xf32>
    %41 = vector.broadcast %40 : vector<1x128xf32> to vector<12x128xf32>
    %42 = arith.mulf %41, %38 : vector<12x128xf32>
    %43 = arith.mulf %42, %23 : vector<12x128xf32>
    %c0_17 = arith.constant 0 : index
    %c0_18 = arith.constant 0 : index
    %c0_19 = arith.constant 0 : index
    %44 = vector.load %arg4[%c0_17, %c0_18, %c0_19] : memref<3x12x1xf32, #tpu.memory_space<vmem>>, vector<1x12x1xf32>
    %45 = vector.shape_cast %44 : vector<1x12x1xf32> to vector<12x1xf32>
    %46 = vector.broadcast %45 : vector<12x1xf32> to vector<12x128xf32>
    %47 = arith.subf %43, %46 : vector<12x128xf32>
    %c0_20 = arith.constant 0 : index
    %c0_21 = arith.constant 0 : index
    %c0_22 = arith.constant 0 : index
    %48 = vector.load %arg5[%c0_20, %c0_21, %c0_22] : memref<3x12x1xf32, #tpu.memory_space<vmem>>, vector<1x12x1xf32>
    %49 = vector.shape_cast %48 : vector<1x12x1xf32> to vector<12x1xf32>
    %50 = vector.broadcast %49 : vector<12x1xf32> to vector<12x128xf32>
    %51 = arith.mulf %47, %50 : vector<12x128xf32>
    %c0_23 = arith.constant 0 : index
    %c0_24 = arith.constant 0 : index
    %52 = vector.load %arg6[%c0_23, %c0_24] : memref<12x128xf32, #tpu.memory_space<vmem>>, vector<12x128xf32>
    tpu.vector_store %arg6[%c0_23, %c0_24], %51 {strides = array<i32>} : memref<12x128xf32, #tpu.memory_space<vmem>>, vector<12x128xf32>,
    %53 = arith.mulf %42, %27 : vector<12x128xf32>
    %c1_25 = arith.constant 1 : index
    %c0_26 = arith.constant 0 : index
    %c0_27 = arith.constant 0 : index
    %54 = vector.load %arg4[%c1_25, %c0_26, %c0_27] : memref<3x12x1xf32, #tpu.memory_space<vmem>>, vector<1x12x1xf32>
    %55 = vector.shape_cast %54 : vector<1x12x1xf32> to vector<12x1xf32>
    %56 = vector.broadcast %55 : vector<12x1xf32> to vector<12x128xf32>
    %57 = arith.subf %53, %56 : vector<12x128xf32>
    %c1_28 = arith.constant 1 : index
    %c0_29 = arith.constant 0 : index
    %c0_30 = arith.constant 0 : index
    %58 = vector.load %arg5[%c1_28, %c0_29, %c0_30] : memref<3x12x1xf32, #tpu.memory_space<vmem>>, vector<1x12x1xf32>
    %59 = vector.shape_cast %58 : vector<1x12x1xf32> to vector<12x1xf32>
    %60 = vector.broadcast %59 : vector<12x1xf32> to vector<12x128xf32>
    %61 = arith.mulf %57, %60 : vector<12x128xf32>
    %c0_31 = arith.constant 0 : index
    %c0_32 = arith.constant 0 : index
    %62 = vector.load %arg7[%c0_31, %c0_32] : memref<12x128xf32, #tpu.memory_space<vmem>>, vector<12x128xf32>
    tpu.vector_store %arg7[%c0_31, %c0_32], %61 {strides = array<i32>} : memref<12x128xf32, #tpu.memory_space<vmem>>, vector<12x128xf32>,
    %63 = vector.broadcast %14 : vector<1x128xf32> to vector<12x128xf32>
    %64 = arith.mulf %42, %63 : vector<12x128xf32>
    %c2_33 = arith.constant 2 : index
    %c0_34 = arith.constant 0 : index
    %c0_35 = arith.constant 0 : index
    %65 = vector.load %arg4[%c2_33, %c0_34, %c0_35] : memref<3x12x1xf32, #tpu.memory_space<vmem>>, vector<1x12x1xf32>
    %66 = vector.shape_cast %65 : vector<1x12x1xf32> to vector<12x1xf32>
    %67 = vector.broadcast %66 : vector<12x1xf32> to vector<12x128xf32>
    %68 = arith.subf %64, %67 : vector<12x128xf32>
    %c2_36 = arith.constant 2 : index
    %c0_37 = arith.constant 0 : index
    %c0_38 = arith.constant 0 : index
    %69 = vector.load %arg5[%c2_36, %c0_37, %c0_38] : memref<3x12x1xf32, #tpu.memory_space<vmem>>, vector<1x12x1xf32>
    %70 = vector.shape_cast %69 : vector<1x12x1xf32> to vector<12x1xf32>
    %71 = vector.broadcast %70 : vector<12x1xf32> to vector<12x128xf32>
    %72 = arith.mulf %68, %71 : vector<12x128xf32>
    %c0_39 = arith.constant 0 : index
    %c0_40 = arith.constant 0 : index
    %73 = vector.load %arg8[%c0_39, %c0_40] : memref<12x128xf32, #tpu.memory_space<vmem>>, vector<12x128xf32>
    tpu.vector_store %arg8[%c0_39, %c0_40], %72 {strides = array<i32>} : memref<12x128xf32, #tpu.memory_space<vmem>>, vector<12x128xf32>,
    return
  }
  func.func @transform_0(%arg0: i32) -> (i32, i32) {
    %c0_i32 = arith.constant 0 : i32
    %c0_i32_0 = arith.constant 0 : i32
    return %c0_i32, %arg0 : i32, i32
  }
  func.func @transform_1(%arg0: i32) -> (i32, i32) {
    %c0_i32 = arith.constant 0 : i32
    %c0_i32_0 = arith.constant 0 : i32
    %c0_i32_1 = arith.constant 0 : i32
    return %c0_i32, %c0_i32_0 : i32, i32
  }
  func.func @transform_2(%arg0: i32) -> (i32, i32) {
    %c0_i32 = arith.constant 0 : i32
    %c0_i32_0 = arith.constant 0 : i32
    %c0_i32_1 = arith.constant 0 : i32
    return %c0_i32, %c0_i32_0 : i32, i32
  }
  func.func @transform_3(%arg0: i32) -> (i32, i32, i32) {
    %c0_i32 = arith.constant 0 : i32
    %c0_i32_0 = arith.constant 0 : i32
    %c0_i32_1 = arith.constant 0 : i32
    %c0_i32_2 = arith.constant 0 : i32
    return %c0_i32, %c0_i32_0, %c0_i32_1 : i32, i32, i32
  }
  func.func @transform_4(%arg0: i32) -> (i32, i32, i32) {
    %c0_i32 = arith.constant 0 : i32
    %c0_i32_0 = arith.constant 0 : i32
    %c0_i32_1 = arith.constant 0 : i32
    %c0_i32_2 = arith.constant 0 : i32
    return %c0_i32, %c0_i32_0, %c0_i32_1 : i32, i32, i32
  }
  func.func @transform_5(%arg0: i32) -> (i32, i32) {
    %c0_i32 = arith.constant 0 : i32
    %c0_i32_0 = arith.constant 0 : i32
    return %c0_i32, %arg0 : i32, i32
  }
  func.func @transform_6(%arg0: i32) -> (i32, i32) {
    %c0_i32 = arith.constant 0 : i32
    %c0_i32_0 = arith.constant 0 : i32
    return %c0_i32, %arg0 : i32, i32
  }
  func.func @transform_7(%arg0: i32) -> (i32, i32) {
    %c0_i32 = arith.constant 0 : i32
    %c0_i32_0 = arith.constant 0 : i32
    return %c0_i32, %arg0 : i32, i32
  }
}

</mosaic_0001>

<llo_original>
// kernel: tpu_custom_call.1
$region0: #{tpu_custom_call.1}
  #allocation0 [shape = 'u32[]', space=smem, size = 0x4, offset = 0x4, fixed_abs, tag = 'smem constant byte address 0x4 - core index']
  #allocation1 [shape = 'u32[72,128]{1,0:T(1,128)}', space=vmem, size = 0x9000, scoped, tag = 'internal scratch']
  %s0 = inlined_call_operand.vmem [shape: f32[4,128], index: 0, kind: input, shape index: {}]
  %s1 = inlined_call_operand.vmem [shape: f32[12,1], index: 1, kind: input, shape index: {}]
  %s2 = inlined_call_operand.vmem [shape: f32[12,1], index: 2, kind: input, shape index: {}]
  %s3 = inlined_call_operand.vmem [shape: f32[3,12,1], index: 3, kind: input, shape index: {}]
  %s4 = inlined_call_operand.vmem [shape: f32[3,12,1], index: 4, kind: input, shape index: {}]
  %s5 = inlined_call_operand.hbm [shape: f32[12,128], index: 5, kind: output, shape index: {0}]
  %s6 = inlined_call_operand.hbm [shape: f32[12,128], index: 6, kind: output, shape index: {1}]
  %s7 = inlined_call_operand.hbm [shape: f32[12,128], index: 7, kind: output, shape index: {2}]
  %8 = xla_tuple %s5, %s6, %s7
  %s9 = sld [smem:[#allocation0]]
  $region46: #{tpu_custom_call.1} parent=0
    _
  %s11 = ssub.s32 1, %s9
  %s12 = scalar_select 0, %s11, %s9
  $region1: #{tpu_custom_call.1} parent=0
    #allocation2 [shape = 'u8[8192]{0}', space=vmem, size = 0x2000, scoped, tag = 'output window, operand 0, single buffered']
    #allocation3 [shape = 's32[1]{0}', space=sflag, size = 0x4, scoped, tag = 'scoped memory for tpu_custom_call.1']
    #allocation4 [shape = 'u8[8192]{0}', space=vmem, size = 0x2000, scoped, tag = 'output window, operand 1, single buffered']
    #allocation5 [shape = 's32[1]{0}', space=sflag, size = 0x4, scoped, tag = 'scoped memory for tpu_custom_call.1']
    #allocation6 [shape = 'u8[8192]{0}', space=vmem, size = 0x2000, scoped, tag = 'output window, operand 2, single buffered']
    %13 = vsyncpa [#allocation3], 0
    %14 = vsyncpa [#allocation5], 0
    // Predicated region
    $region2: #{tpu_custom_call.1} parent=1 // pred_check
      _
    $region3: #{tpu_custom_call.1} parent=1 // pred_check_branch
      %16 = sbr.rel (0) target = $region5
    $region4: #{tpu_custom_call.1} parent=1 // pred_region
      _
    $region5: #{tpu_custom_call.1} parent=1 // pred_fallthru
      _
    // Predicated region
    $region6: #{tpu_custom_call.1} parent=1 // pred_check
      _
    $region7: #{tpu_custom_call.1} parent=1 // pred_check_branch
      %18 = sbr.rel (0) target = $region9
    $region8: #{tpu_custom_call.1} parent=1 // pred_region
      _
    $region9: #{tpu_custom_call.1} parent=1 // pred_fallthru
      _
    // Predicated region
    $region10: #{tpu_custom_call.1} parent=1 // pred_check
      _
    $region11: #{tpu_custom_call.1} parent=1 // pred_check_branch
      %20 = sbr.rel (0) target = $region13
    $region12: #{tpu_custom_call.1} parent=1 // pred_region
      _
    $region13: #{tpu_custom_call.1} parent=1 // pred_fallthru
      _
    // Predicated region
    $region14: #{tpu_custom_call.1} parent=1 // pred_check
      _
    $region15: #{tpu_custom_call.1} parent=1 // pred_check_branch
      %22 = sbr.rel (0) target = $region17
    $region16: #{tpu_custom_call.1} parent=1 // pred_region
      _
    $region17: #{tpu_custom_call.1} parent=1 // pred_fallthru
      _
    // Predicated region
    $region18: #{tpu_custom_call.1} parent=1 // pred_check
      _
    $region19: #{tpu_custom_call.1} parent=1 // pred_check_branch
      %24 = sbr.rel (0) target = $region21
    $region20: #{tpu_custom_call.1} parent=1 // pred_region
      _
    $region21: #{tpu_custom_call.1} parent=1 // pred_fallthru
      _
    %v25 = vld [vmem:[%s0] sm:$0x1]
    %v26 = vmul.f32 %v25, 10000.0
    %v27 = vadd.f32 %v26, -5000.0
    %v28 = vld [vmem:[%s0 + $0x1] sm:$0x1]
    %v29 = vmul.f32 %v28, 10000.0
    %v30 = vadd.f32 %v29, -5000.0
    %v31 = vld [vmem:[%s0 + $0x2] sm:$0x1]
    %v32 = vmul.f32 %v31, 9000.0
    %v33 = vadd.f32 %v32, 1000.0
    %v34 = vld [vmem:[%s0 + $0x3] sm:$0x1]
    %v35 = vmul.f32 %v34, 30000000.0
    %v36 = vadd.f32 %v35, -10000000.0
    %v37 = vld [vmem:[%s1] sm:$0xff]
    %v38 = vld [vmem:[%s1 + $0x8] sm:$0xf]
    %40 = vset.pattern.permute.xlu0 0
    %41 = vperm.xlu0 %40, %v37
    %v42 = vpop.permute.xlu0 %41
    %45 = vset.pattern.permute.xlu0 0
    %46 = vperm.xlu0 %45, %v38
    %v47 = vpop.permute.xlu0 %46
    %v49 = vperm.slane %v27, 0
    %v50 = vsub.f32 %v42, %v49
    %v51 = vsub.f32 %v47, %v49
    %v52 = vld [vmem:[%s2] sm:$0xff]
    %v53 = vld [vmem:[%s2 + $0x8] sm:$0xf]
    %55 = vset.pattern.permute.xlu0 0
    %56 = vperm.xlu0 %55, %v52
    %v57 = vpop.permute.xlu0 %56
    %60 = vset.pattern.permute.xlu0 0
    %61 = vperm.xlu0 %60, %v53
    %v62 = vpop.permute.xlu0 %61
    %v64 = vperm.slane %v30, 0
    %v65 = vsub.f32 %v57, %v64
    %v66 = vsub.f32 %v62, %v64
    %v67 = vmul.f32 %v50, %v50
    %v68 = vmul.f32 %v51, %v51
    %v69 = vmul.f32 %v65, %v65
    %v70 = vmul.f32 %v66, %v66
    %v71 = vadd.f32 %v67, %v69
    %v72 = vadd.f32 %v68, %v70
    %v73 = vmul.f32 %v33, %v33
    %v74 = vperm.slane %v73, 0
    %v75 = vadd.f32 %v71, %v74
    %v76 = vadd.f32 %v72, %v74
    %v77 = vmax.f32 %v75, 1e-12
    %v78 = vmax.f32 %v76, 1e-12
    %v79 = vrsqrt.pop %v77
    %v80 = vmul.f32 %v79, %v77
    %v81 = vmul.f32 %v80, %v79
    %v82 = vmul.f32 0.5, %v81
    %v83 = vsub.f32 1.5, %v82
    %v84 = vmul.f32 %v79, %v83
    %vm85 = vweird.f32 %v77
    %vm86 = vweird.f32 %v79
    %vm87 = vmor %vm85, %vm86
    %v88 = vsel %vm87, %v79, %v84
    %v89 = vrsqrt.pop %v78
    %v90 = vmul.f32 %v89, %v78
    %v91 = vmul.f32 %v90, %v89
    %v92 = vmul.f32 0.5, %v91
    %v93 = vsub.f32 1.5, %v92
    %v94 = vmul.f32 %v89, %v93
    %vm95 = vweird.f32 %v78
    %vm96 = vweird.f32 %v89
    %vm97 = vmor %vm95, %vm96
    %v98 = vsel %vm97, %v89, %v94
    %v99 = vmul.f32 %v88, %v88
    %v100 = vmul.f32 %v98, %v98
    %v101 = vmul.f32 %v99, %v88
    %v102 = vmul.f32 %v100, %v98
    %v103 = vmul.f32 %v36, 0.23873241
    %v104 = vperm.slane %v103, 0
    %v105 = vmul.f32 %v104, %v101
    %v106 = vmul.f32 %v104, %v102
    %v107 = vmul.f32 %v105, %v50
    %v108 = vmul.f32 %v106, %v51
    %v109 = vld [vmem:[%s3] sm:$0xff]
    %v110 = vld [vmem:[%s3 + $0x8] sm:$0xf]
    %112 = vset.pattern.permute.xlu0 0
    %113 = vperm.xlu0 %112, %v109
    %v114 = vpop.permute.xlu0 %113
    %117 = vset.pattern.permute.xlu0 0
    %118 = vperm.xlu0 %117, %v110
    %v119 = vpop.permute.xlu0 %118
    %v121 = vsub.f32 %v107, %v114
    %v122 = vsub.f32 %v108, %v119
    %v123 = vld [vmem:[%s4] sm:$0xff]
    %v124 = vld [vmem:[%s4 + $0x8] sm:$0xf]
    %126 = vset.pattern.permute.xlu0 0
    %127 = vperm.xlu0 %126, %v123
    %v128 = vpop.permute.xlu0 %127
    %131 = vset.pattern.permute.xlu0 0
    %132 = vperm.xlu0 %131, %v124
    %v133 = vpop.permute.xlu0 %132
    %v135 = vmul.f32 %v121, %v128
    %v136 = vmul.f32 %v122, %v133
    %137 = vst [vmem:[#allocation2] sm:$0xff] %v135
    %138 = vst [vmem:[#allocation2 + $0x8] sm:$0xf] %v136
    %v139 = vmul.f32 %v105, %v65
    %v140 = vmul.f32 %v106, %v66
    %s141 = scalar_lea.vmem %s3, 16
    %v142 = vld [vmem:[%s141] sm:$0xff]
    %v143 = vld [vmem:[%s141 + $0x8] sm:$0xf]
    %145 = vset.pattern.permute.xlu0 0
    %146 = vperm.xlu0 %145, %v142
    %v147 = vpop.permute.xlu0 %146
    %150 = vset.pattern.permute.xlu0 0
    %151 = vperm.xlu0 %150, %v143
    %v152 = vpop.permute.xlu0 %151
    %v154 = vsub.f32 %v139, %v147
    %v155 = vsub.f32 %v140, %v152
    %s156 = scalar_lea.vmem %s4, 16
    %v157 = vld [vmem:[%s156] sm:$0xff]
    %v158 = vld [vmem:[%s156 + $0x8] sm:$0xf]
    %160 = vset.pattern.permute.xlu0 0
    %161 = vperm.xlu0 %160, %v157
    %v162 = vpop.permute.xlu0 %161
    %165 = vset.pattern.permute.xlu0 0
    %166 = vperm.xlu0 %165, %v158
    %v167 = vpop.permute.xlu0 %166
    %v169 = vmul.f32 %v154, %v162
    %v170 = vmul.f32 %v155, %v167
    %171 = vst [vmem:[#allocation4] sm:$0xff] %v169
    %172 = vst [vmem:[#allocation4 + $0x8] sm:$0xf] %v170
    %v173 = vperm.slane %v33, 0
    %v174 = vmul.f32 %v105, %v173
    %v175 = vmul.f32 %v106, %v173
    %s176 = scalar_lea.vmem %s3, 32
    %v177 = vld [vmem:[%s176] sm:$0xff]
    %v178 = vld [vmem:[%s176 + $0x8] sm:$0xf]
    %180 = vset.pattern.permute.xlu0 0
    %181 = vperm.xlu0 %180, %v177
    %v182 = vpop.permute.xlu0 %181
    %185 = vset.pattern.permute.xlu0 0
    %186 = vperm.xlu0 %185, %v178
    %v187 = vpop.permute.xlu0 %186
    %v189 = vsub.f32 %v174, %v182
    %v190 = vsub.f32 %v175, %v187
    %s191 = scalar_lea.vmem %s4, 32
    %v192 = vld [vmem:[%s191] sm:$0xff]
    %v193 = vld [vmem:[%s191 + $0x8] sm:$0xf]
    %195 = vset.pattern.permute.xlu0 0
    %196 = vperm.xlu0 %195, %v192
    %v197 = vpop.permute.xlu0 %196
    %200 = vset.pattern.permute.xlu0 0
    %201 = vperm.xlu0 %200, %v193
    %v202 = vpop.permute.xlu0 %201
    %v204 = vmul.f32 %v189, %v197
    %v205 = vmul.f32 %v190, %v202
    %206 = vst [vmem:[#allocation6] sm:$0xff] %v204
    %207 = vst [vmem:[#allocation6 + $0x8] sm:$0xf] %v205
    // Predicated region
    $region22: #{tpu_custom_call.1} parent=1 // pred_check
      _
    $region23: #{tpu_custom_call.1} parent=1 // pred_check_branch
      %209 = sbr.rel (0) target = $region25
    $region24: #{tpu_custom_call.1} parent=1 // pred_region
      %211 = vsyncadd [#allocation3], 0
      %s212 = sshll.u32 [#allocation2], 4
      %s213 = int_to_ptr.vmem [resolvable:$true] %s212
      %s214 = sshll.u32 %s5, 4
      %s215 = int_to_ptr.hbm [resolvable:$true] %s214
      %220 = dma.vmem_to_hbm [thread:$0]  %s213, 256, %s215, [#allocation3], 128, 128, 8
    $region25: #{tpu_custom_call.1} parent=1 // pred_fallthru
      _
    // Predicated region
    $region26: #{tpu_custom_call.1} parent=1 // pred_check
      _
    $region27: #{tpu_custom_call.1} parent=1 // pred_check_branch
      %222 = sbr.rel (0) target = $region29
    $region28: #{tpu_custom_call.1} parent=1 // pred_region
      %224 = vsyncadd [#allocation5], 0
      %s225 = sshll.u32 [#allocation4], 4
      %s226 = int_to_ptr.vmem [resolvable:$true] %s225
      %s227 = sshll.u32 %s6, 4
      %s228 = int_to_ptr.hbm [resolvable:$true] %s227
      %233 = dma.vmem_to_hbm [thread:$0]  %s226, 256, %s228, [#allocation5], 128, 128, 8
    $region29: #{tpu_custom_call.1} parent=1 // pred_fallthru
      _
    // Predicated region
    $region30: #{tpu_custom_call.1} parent=1 // pred_check
      _
    $region31: #{tpu_custom_call.1} parent=1 // pred_check_branch
      %235 = sbr.rel (0) target = $region33
    $region32: #{tpu_custom_call.1} parent=1 // pred_region
      %237 = vsyncadd [#allocation5], 0
      %s238 = sshll.u32 [#allocation6], 4
      %s239 = int_to_ptr.vmem [resolvable:$true] %s238
      %s240 = sshll.u32 %s7, 4
      %s241 = int_to_ptr.hbm [resolvable:$true] %s240
      %246 = dma.vmem_to_hbm [thread:$0]  %s239, 256, %s241, [#allocation5], 128, 128, 8
    $region33: #{tpu_custom_call.1} parent=1 // pred_fallthru
      _
    // Predicated region
    $region34: #{tpu_custom_call.1} parent=1 // pred_check
      _
    $region35: #{tpu_custom_call.1} parent=1 // pred_check_branch
      %248 = sbr.rel (0) target = $region37
    $region36: #{tpu_custom_call.1} parent=1 // pred_region
      %250 = dma.done [#allocation3], 256
    $region37: #{tpu_custom_call.1} parent=1 // pred_fallthru
      _
    // Predicated region
    $region38: #{tpu_custom_call.1} parent=1 // pred_check
      _
    $region39: #{tpu_custom_call.1} parent=1 // pred_check_branch
      %252 = sbr.rel (0) target = $region41
    $region40: #{tpu_custom_call.1} parent=1 // pred_region
      %254 = dma.done [#allocation5], 256
    $region41: #{tpu_custom_call.1} parent=1 // pred_fallthru
      _
    // Predicated region
    $region42: #{tpu_custom_call.1} parent=1 // pred_check
      _
    $region43: #{tpu_custom_call.1} parent=1 // pred_check_branch
      %256 = sbr.rel (0) target = $region45
    $region44: #{tpu_custom_call.1} parent=1 // pred_region
      %258 = dma.done [#allocation5], 256
    $region45: #{tpu_custom_call.1} parent=1 // pred_fallthru
      _
    %259 = vsyncpa [#allocation3], 1
    %260 = vsyncpa [#allocation5], 1

</llo_original>
